<compile_context>
chip_gen: v5e
topology: v5e:2x2
jax: 0.10.0
libtpu: 0.0.40
codegen_flags: <defaults>
</compile_context>

<pallas_src>
import jax
import jax.numpy as jnp
from jax import lax
from jax.experimental import pallas as pl
from jax.experimental.pallas import tpu as pltpu


def _round_up(x, m):
    return (x + m - 1) // m * m


def _pick_time_block(s, cap=32):
    """Largest divisor of s that is <= cap (keeps full unroll cheap)."""
    t = min(s, cap)
    while s % t:
        t -= 1
    return t


def _rnn_kernel(x_ref, h0_ref, wih_ref, whh_ref, b_ref, wout_ref, bout_ref,
                out_ref, hlast_ref, xw_ref, hist_ref):
    """One grid step = one block of T_BLK timesteps.

    x_ref:     (T_BLK*Bp, I)   inputs for this time block (batch on sublanes)
    h0_ref:    (Bp, Hp)        initial hidden state
    wih_ref:   (I, Hp)         W_ih^T (padded)
    whh_ref:   (Hp, Hp)        W_hh^T (padded)
    b_ref:     (1, Hp)         b_ih + b_hh (padded)
    wout_ref:  (Hp, Op)        W_out^T (padded)
    bout_ref:  (1, Op)         b_out (padded)
    out_ref:   (T_BLK*Bp, Op)  linear-head output for this block
    hlast_ref: (Bp, Hp)        resident carried hidden state (final = h_T)
    xw_ref, hist_ref: (T_BLK*Bp, Hp) f32 VMEM scratch
    """
    tb = pl.program_id(0)
    bp, _ = hlast_ref.shape
    n_steps = hist_ref.shape[0] // bp

    # Initialize the carried hidden state from h0 on the first time block.
    @pl.when(tb == 0)
    def _():
        hlast_ref[...] = h0_ref[...]

    # Hoisted input projection: one GEMM per time block, bias folded in.
    xw_ref[...] = (
        jnp.dot(x_ref[...], wih_ref[...], preferred_element_type=jnp.float32)
        + b_ref[...]
    )

    whh = whh_ref[...]

    def step(i, h_prev):
        r0 = pl.multiple_of(i * bp, bp)
        xw_i = xw_ref[pl.ds(r0, bp), :]
        h_new = jnp.tanh(
            xw_i + jnp.dot(h_prev, whh, preferred_element_type=jnp.float32))
        hist_ref[pl.ds(r0, bp), :] = h_new
        return h_new

    h_final = lax.fori_loop(0, n_steps, step, hlast_ref[...], unroll=True)
    hlast_ref[...] = h_final

    # Hoisted output head: one lane-dense GEMM over the whole time block.
    out_ref[...] = (
        jnp.dot(hist_ref[...], wout_ref[...],
                preferred_element_type=jnp.float32)
        + bout_ref[...]
    ).astype(out_ref.dtype)


@jax.jit
def rnn_forward(input_y, h0, w_ih, w_hh, b_ih, b_hh, w_out, b_out):
    """Pallas implementation of RNN.forward.

    input_y: (S, B, I) f32  (seq-first, nn.RNN default batch_first=False)
    h0:      (B, H)    f32  (PyTorch uses zeros when h=None)
    w_ih: (H, I), w_hh: (H, H), b_ih/b_hh: (H,), w_out: (O, H), b_out: (O,)
    Returns: output (S, B, O), last hidden (1, B, H)
    """
    S, B, I = input_y.shape
    H = w_hh.shape[0]
    O = w_out.shape[0]

    # Lane/sublane-dense padded sizes.
    Bp = _round_up(B, 8)
    Hp = _round_up(H, 128)
    Op = _round_up(O, 128)
    T_BLK = _pick_time_block(S)
    n_blocks = S // T_BLK

    # Pad once outside the kernel (all-zero padding keeps padded hidden lanes
    # exactly zero through the recurrence), and fold the two RNN biases.
    x_p = jnp.pad(input_y, ((0, 0), (0, Bp - B), (0, 0))).reshape(S * Bp, I)
    h0_p = jnp.pad(h0, ((0, Bp - B), (0, Hp - H)))
    wih_t = jnp.pad(jnp.transpose(w_ih), ((0, 0), (0, Hp - H)))          # (I, Hp)
    whh_t = jnp.pad(jnp.transpose(w_hh), ((0, Hp - H), (0, Hp - H)))     # (Hp, Hp)
    b_comb = jnp.pad(b_ih + b_hh, ((0, Hp - H),)).reshape(1, Hp)         # (1, Hp)
    wout_t = jnp.pad(jnp.transpose(w_out), ((0, Hp - H), (0, Op - O)))   # (Hp, Op)
    bout_p = jnp.pad(b_out, ((0, Op - O),)).reshape(1, Op)               # (1, Op)

    grid_spec = pltpu.PrefetchScalarGridSpec(
        num_scalar_prefetch=0,
        grid=(n_blocks,),
        in_specs=[
            pl.BlockSpec((T_BLK * Bp, I), lambda t: (t, 0)),   # x time-block
            pl.BlockSpec((Bp, Hp), lambda t: (0, 0)),          # h0
            pl.BlockSpec((I, Hp), lambda t: (0, 0)),           # W_ih^T
            pl.BlockSpec((Hp, Hp), lambda t: (0, 0)),          # W_hh^T
            pl.BlockSpec((1, Hp), lambda t: (0, 0)),           # b_ih + b_hh
            pl.BlockSpec((Hp, Op), lambda t: (0, 0)),          # W_out^T
            pl.BlockSpec((1, Op), lambda t: (0, 0)),           # b_out
        ],
        out_specs=[
            pl.BlockSpec((T_BLK * Bp, Op), lambda t: (t, 0)),  # head output
            pl.BlockSpec((Bp, Hp), lambda t: (0, 0)),          # last hidden
        ],
        scratch_shapes=[
            pltpu.VMEM((T_BLK * Bp, Hp), jnp.float32),   # hoisted x @ W_ih^T
            pltpu.VMEM((T_BLK * Bp, Hp), jnp.float32),   # hidden-state history
        ],
    )

    out_p, h_last_p = pl.pallas_call(
        _rnn_kernel,
        grid_spec=grid_spec,
        out_shape=[
            jax.ShapeDtypeStruct((S * Bp, Op), jnp.float32),
            jax.ShapeDtypeStruct((Bp, Hp), jnp.float32),
        ],
        compiler_params=pltpu.CompilerParams(
            # The time axis is a true recurrence -> "arbitrary".  (On v7x a
            # second "parallel" batch/hidden-tile grid axis would engage the
            # second TensorCore, but at Bp=8 there is nothing to split.)
            dimension_semantics=("arbitrary",),
        ),
    )(x_p, h0_p, wih_t, whh_t, b_comb, wout_t, bout_p)

    output = out_p.reshape(S, Bp, Op)[:, :B, :O]
    h_last = h_last_p[:B, :H].reshape(1, B, H)
    return output, h_last


def _reference_forward(input_y, h0, w_ih, w_hh, b_ih, b_hh, w_out, b_out):
    """Plain-JAX reference of the same forward pass (for verification)."""
    def step(h, x_t):
        h_new = jnp.tanh(x_t @ w_ih.T + b_ih + h @ w_hh.T + b_hh)
        return h_new, h_new

    h_last, rnn_out = jax.lax.scan(step, h0, input_y)
    out = rnn_out @ w_out.T + b_out
    return out, h_last[None]


if __name__ == "__main__":
    # Small shapes consistent with the module's forward.
    S, B = 8, 2          # seq_len, batch
    I, H, O = 4, 32, 3   # input_size, hidden_size, output_size

    key = jax.random.PRNGKey(0)
    ks = jax.random.split(key, 8)
    bound = 1.0 / jnp.sqrt(jnp.float32(H))

    input_y = jax.random.normal(ks[0], (S, B, I), dtype=jnp.float32)
    h0 = jnp.zeros((B, H), dtype=jnp.float32)  # PyTorch uses zeros when h=None

    w_ih = jax.random.uniform(ks[1], (H, I), minval=-bound, maxval=bound,
                              dtype=jnp.float32)
    w_hh = jax.random.uniform(ks[2], (H, H), minval=-bound, maxval=bound,
                              dtype=jnp.float32)
    b_ih = jax.random.uniform(ks[3], (H,), minval=-bound, maxval=bound,
                              dtype=jnp.float32)
    b_hh = jax.random.uniform(ks[4], (H,), minval=-bound, maxval=bound,
                              dtype=jnp.float32)
    w_out = jax.random.uniform(ks[5], (O, H), minval=-bound, maxval=bound,
                               dtype=jnp.float32)
    b_out = jax.random.uniform(ks[6], (O,), minval=-bound, maxval=bound,
                               dtype=jnp.float32)

    output, h_last = rnn_forward(input_y, h0, w_ih, w_hh, b_ih, b_hh,
                                 w_out, b_out)
    jax.block_until_ready((output, h_last))

    ref_out, ref_h = _reference_forward(input_y, h0, w_ih, w_hh, b_ih, b_hh,
                                        w_out, b_out)
    assert output.shape == (S, B, O) and h_last.shape == (1, B, H)
    assert jnp.allclose(output, ref_out, atol=1e-5, rtol=1e-5)
    assert jnp.allclose(h_last, ref_h, atol=1e-5, rtol=1e-5)

    print("KERNEL_OK")
</pallas_src>

<mosaic_0001>
module attributes {stable_mosaic.version = 11 : i64} {
  func.func @_rnn_kernel(%arg0: i32, %arg1: memref<64x4xf32, #tpu.memory_space<vmem>>, %arg2: memref<8x128xf32, #tpu.memory_space<vmem>>, %arg3: memref<4x128xf32, #tpu.memory_space<vmem>>, %arg4: memref<128x128xf32, #tpu.memory_space<vmem>>, %arg5: memref<1x128xf32, #tpu.memory_space<vmem>>, %arg6: memref<128x128xf32, #tpu.memory_space<vmem>>, %arg7: memref<1x128xf32, #tpu.memory_space<vmem>>, %arg8: memref<64x128xf32, #tpu.memory_space<vmem>>, %arg9: memref<8x128xf32, #tpu.memory_space<vmem>>, %arg10: memref<64x128xf32, #tpu.memory_space<vmem>>, %arg11: memref<64x128xf32, #tpu.memory_space<vmem>>) attributes {dimension_semantics = [#tpu.dimension_semantics<arbitrary>], iteration_bounds = array<i64: 1>, scalar_prefetch = 0 : i64, scratch_operands = 2 : i64, tpu.core_type = #tpu.core_type<tc>, window_params = [{transform_indices = @transform_0, window_bounds = array<i64: 64, 4>}, {pipeline_mode = #tpu.pipeline_mode<synchronous>, transform_indices = @transform_1, window_bounds = array<i64: 8, 128>}, {pipeline_mode = #tpu.pipeline_mode<synchronous>, transform_indices = @transform_2, window_bounds = array<i64: 4, 128>}, {pipeline_mode = #tpu.pipeline_mode<synchronous>, transform_indices = @transform_3, window_bounds = array<i64: 128, 128>}, {pipeline_mode = #tpu.pipeline_mode<synchronous>, transform_indices = @transform_4, window_bounds = array<i64: 1, 128>}, {pipeline_mode = #tpu.pipeline_mode<synchronous>, transform_indices = @transform_5, window_bounds = array<i64: 128, 128>}, {pipeline_mode = #tpu.pipeline_mode<synchronous>, transform_indices = @transform_6, window_bounds = array<i64: 1, 128>}, {transform_indices = @transform_7, window_bounds = array<i64: 64, 128>}, {pipeline_mode = #tpu.pipeline_mode<synchronous>, transform_indices = @transform_8, window_bounds = array<i64: 8, 128>}]} {
    %c0_i32 = arith.constant 0 : i32
    %0 = arith.cmpi eq, %arg0, %c0_i32 : i32
    %1 = arith.extui %0 : i1 to i32
    %c0_i32_0 = arith.constant 0 : i32
    %2 = arith.cmpi ne, %1, %c0_i32_0 : i32
    scf.if %2 {
      %c0_56 = arith.constant 0 : index
      %c0_57 = arith.constant 0 : index
      %92 = vector.load %arg2[%c0_56, %c0_57] : memref<8x128xf32, #tpu.memory_space<vmem>>, vector<8x128xf32>
      %c0_58 = arith.constant 0 : index
      %c0_59 = arith.constant 0 : index
      %93 = vector.load %arg9[%c0_58, %c0_59] : memref<8x128xf32, #tpu.memory_space<vmem>>, vector<8x128xf32>
      tpu.vector_store %arg9[%c0_58, %c0_59], %92 {strides = array<i32>} : memref<8x128xf32, #tpu.memory_space<vmem>>, vector<8x128xf32>,
    } else {
    }
    %c0 = arith.constant 0 : index
    %c0_1 = arith.constant 0 : index
    %3 = vector.load %arg1[%c0, %c0_1] : memref<64x4xf32, #tpu.memory_space<vmem>>, vector<64x4xf32>
    %c0_2 = arith.constant 0 : index
    %c0_3 = arith.constant 0 : index
    %4 = vector.load %arg3[%c0_2, %c0_3] : memref<4x128xf32, #tpu.memory_space<vmem>>, vector<4x128xf32>
    %cst = arith.constant dense<0.000000e+00> : vector<64x128xf32>
    %5 = tpu.matmul %3, %4, %cst {dimension_numbers = #tpu.dot_dimension_numbers<[1], [0], [0], [1], [0, 0, 1, 1], [], []>} : vector<64x4xf32>, vector<4x128xf32>, vector<64x128xf32> -> vector<64x128xf32>
    %c0_4 = arith.constant 0 : index
    %c0_5 = arith.constant 0 : index
    %6 = vector.load %arg5[%c0_4, %c0_5] : memref<1x128xf32, #tpu.memory_space<vmem>>, vector<1x128xf32>
    %7 = vector.broadcast %6 : vector<1x128xf32> to vector<64x128xf32>
    %8 = arith.addf %5, %7 : vector<64x128xf32>
    %c0_6 = arith.constant 0 : index
    %c0_7 = arith.constant 0 : index
    %9 = vector.load %arg10[%c0_6, %c0_7] : memref<64x128xf32, #tpu.memory_space<vmem>>, vector<64x128xf32>
    tpu.vector_store %arg10[%c0_6, %c0_7], %8 {strides = array<i32>} : memref<64x128xf32, #tpu.memory_space<vmem>>, vector<64x128xf32>,
    %c0_8 = arith.constant 0 : index
    %c0_9 = arith.constant 0 : index
    %10 = vector.load %arg4[%c0_8, %c0_9] : memref<128x128xf32, #tpu.memory_space<vmem>>, vector<128x128xf32>
    %c0_10 = arith.constant 0 : index
    %c0_11 = arith.constant 0 : index
    %11 = vector.load %arg9[%c0_10, %c0_11] : memref<8x128xf32, #tpu.memory_space<vmem>>, vector<8x128xf32>
    %c0_i32_12 = arith.constant 0 : i32
    %c8_i32 = arith.constant 8 : i32
    %12 = arith.muli %c0_i32_12, %c8_i32 : i32
    %13 = tpu.assume_multiple %12, 8 : i32
    %14 = arith.index_cast %13 : i32 to index
    %c0_13 = arith.constant 0 : index
    %15 = vector.load %arg10[%14, %c0_13] : memref<64x128xf32, #tpu.memory_space<vmem>>, vector<8x128xf32>
    %cst_14 = arith.constant dense<0.000000e+00> : vector<8x128xf32>
    %16 = tpu.matmul %11, %10, %cst_14 {dimension_numbers = #tpu.dot_dimension_numbers<[1], [0], [0], [1], [0, 0, 1, 1], [], []>} : vector<8x128xf32>, vector<128x128xf32>, vector<8x128xf32> -> vector<8x128xf32>
    %17 = arith.addf %15, %16 : vector<8x128xf32>
    %18 = math.tanh %17 : vector<8x128xf32>
    %19 = arith.index_cast %13 : i32 to index
    %c0_15 = arith.constant 0 : index
    %20 = vector.load %arg11[%19, %c0_15] : memref<64x128xf32, #tpu.memory_space<vmem>>, vector<8x128xf32>
    tpu.vector_store %arg11[%19, %c0_15], %18 {strides = array<i32>} : memref<64x128xf32, #tpu.memory_space<vmem>>, vector<8x128xf32>,
    %c1_i32 = arith.constant 1 : i32
    %c8_i32_16 = arith.constant 8 : i32
    %21 = arith.muli %c1_i32, %c8_i32_16 : i32
    %22 = tpu.assume_multiple %21, 8 : i32
    %23 = arith.index_cast %22 : i32 to index
    %c0_17 = arith.constant 0 : index
    %24 = vector.load %arg10[%23, %c0_17] : memref<64x128xf32, #tpu.memory_space<vmem>>, vector<8x128xf32>
    %cst_18 = arith.constant dense<0.000000e+00> : vector<8x128xf32>
    %25 = tpu.matmul %18, %10, %cst_18 {dimension_numbers = #tpu.dot_dimension_numbers<[1], [0], [0], [1], [0, 0, 1, 1], [], []>} : vector<8x128xf32>, vector<128x128xf32>, vector<8x128xf32> -> vector<8x128xf32>
    %26 = arith.addf %24, %25 : vector<8x128xf32>
    %27 = math.tanh %26 : vector<8x128xf32>
    %28 = arith.index_cast %22 : i32 to index
    %c0_19 = arith.constant 0 : index
    %29 = vector.load %arg11[%28, %c0_19] : memref<64x128xf32, #tpu.memory_space<vmem>>, vector<8x128xf32>
    tpu.vector_store %arg11[%28, %c0_19], %27 {strides = array<i32>} : memref<64x128xf32, #tpu.memory_space<vmem>>, vector<8x128xf32>,
    %c2_i32 = arith.constant 2 : i32
    %c8_i32_20 = arith.constant 8 : i32
    %30 = arith.muli %c2_i32, %c8_i32_20 : i32
    %31 = tpu.assume_multiple %30, 8 : i32
    %32 = arith.index_cast %31 : i32 to index
    %c0_21 = arith.constant 0 : index
    %33 = vector.load %arg10[%32, %c0_21] : memref<64x128xf32, #tpu.memory_space<vmem>>, vector<8x128xf32>
    %cst_22 = arith.constant dense<0.000000e+00> : vector<8x128xf32>
    %34 = tpu.matmul %27, %10, %cst_22 {dimension_numbers = #tpu.dot_dimension_numbers<[1], [0], [0], [1], [0, 0, 1, 1], [], []>} : vector<8x128xf32>, vector<128x128xf32>, vector<8x128xf32> -> vector<8x128xf32>
    %35 = arith.addf %33, %34 : vector<8x128xf32>
    %36 = math.tanh %35 : vector<8x128xf32>
    %37 = arith.index_cast %31 : i32 to index
    %c0_23 = arith.constant 0 : index
    %38 = vector.load %arg11[%37, %c0_23] : memref<64x128xf32, #tpu.memory_space<vmem>>, vector<8x128xf32>
    tpu.vector_store %arg11[%37, %c0_23], %36 {strides = array<i32>} : memref<64x128xf32, #tpu.memory_space<vmem>>, vector<8x128xf32>,
    %c3_i32 = arith.constant 3 : i32
    %c8_i32_24 = arith.constant 8 : i32
    %39 = arith.muli %c3_i32, %c8_i32_24 : i32
    %40 = tpu.assume_multiple %39, 8 : i32
    %41 = arith.index_cast %40 : i32 to index
    %c0_25 = arith.constant 0 : index
    %42 = vector.load %arg10[%41, %c0_25] : memref<64x128xf32, #tpu.memory_space<vmem>>, vector<8x128xf32>
    %cst_26 = arith.constant dense<0.000000e+00> : vector<8x128xf32>
    %43 = tpu.matmul %36, %10, %cst_26 {dimension_numbers = #tpu.dot_dimension_numbers<[1], [0], [0], [1], [0, 0, 1, 1], [], []>} : vector<8x128xf32>, vector<128x128xf32>, vector<8x128xf32> -> vector<8x128xf32>
    %44 = arith.addf %42, %43 : vector<8x128xf32>
    %45 = math.tanh %44 : vector<8x128xf32>
    %46 = arith.index_cast %40 : i32 to index
    %c0_27 = arith.constant 0 : index
    %47 = vector.load %arg11[%46, %c0_27] : memref<64x128xf32, #tpu.memory_space<vmem>>, vector<8x128xf32>
    tpu.vector_store %arg11[%46, %c0_27], %45 {strides = array<i32>} : memref<64x128xf32, #tpu.memory_space<vmem>>, vector<8x128xf32>,
    %c4_i32 = arith.constant 4 : i32
    %c8_i32_28 = arith.constant 8 : i32
    %48 = arith.muli %c4_i32, %c8_i32_28 : i32
    %49 = tpu.assume_multiple %48, 8 : i32
    %50 = arith.index_cast %49 : i32 to index
    %c0_29 = arith.constant 0 : index
    %51 = vector.load %arg10[%50, %c0_29] : memref<64x128xf32, #tpu.memory_space<vmem>>, vector<8x128xf32>
    %cst_30 = arith.constant dense<0.000000e+00> : vector<8x128xf32>
    %52 = tpu.matmul %45, %10, %cst_30 {dimension_numbers = #tpu.dot_dimension_numbers<[1], [0], [0], [1], [0, 0, 1, 1], [], []>} : vector<8x128xf32>, vector<128x128xf32>, vector<8x128xf32> -> vector<8x128xf32>
    %53 = arith.addf %51, %52 : vector<8x128xf32>
    %54 = math.tanh %53 : vector<8x128xf32>
    %55 = arith.index_cast %49 : i32 to index
    %c0_31 = arith.constant 0 : index
    %56 = vector.load %arg11[%55, %c0_31] : memref<64x128xf32, #tpu.memory_space<vmem>>, vector<8x128xf32>
    tpu.vector_store %arg11[%55, %c0_31], %54 {strides = array<i32>} : memref<64x128xf32, #tpu.memory_space<vmem>>, vector<8x128xf32>,
    %c5_i32 = arith.constant 5 : i32
    %c8_i32_32 = arith.constant 8 : i32
    %57 = arith.muli %c5_i32, %c8_i32_32 : i32
    %58 = tpu.assume_multiple %57, 8 : i32
    %59 = arith.index_cast %58 : i32 to index
    %c0_33 = arith.constant 0 : index
    %60 = vector.load %arg10[%59, %c0_33] : memref<64x128xf32, #tpu.memory_space<vmem>>, vector<8x128xf32>
    %cst_34 = arith.constant dense<0.000000e+00> : vector<8x128xf32>
    %61 = tpu.matmul %54, %10, %cst_34 {dimension_numbers = #tpu.dot_dimension_numbers<[1], [0], [0], [1], [0, 0, 1, 1], [], []>} : vector<8x128xf32>, vector<128x128xf32>, vector<8x128xf32> -> vector<8x128xf32>
    %62 = arith.addf %60, %61 : vector<8x128xf32>
    %63 = math.tanh %62 : vector<8x128xf32>
    %64 = arith.index_cast %58 : i32 to index
    %c0_35 = arith.constant 0 : index
    %65 = vector.load %arg11[%64, %c0_35] : memref<64x128xf32, #tpu.memory_space<vmem>>, vector<8x128xf32>
    tpu.vector_store %arg11[%64, %c0_35], %63 {strides = array<i32>} : memref<64x128xf32, #tpu.memory_space<vmem>>, vector<8x128xf32>,
    %c6_i32 = arith.constant 6 : i32
    %c8_i32_36 = arith.constant 8 : i32
    %66 = arith.muli %c6_i32, %c8_i32_36 : i32
    %67 = tpu.assume_multiple %66, 8 : i32
    %68 = arith.index_cast %67 : i32 to index
    %c0_37 = arith.constant 0 : index
    %69 = vector.load %arg10[%68, %c0_37] : memref<64x128xf32, #tpu.memory_space<vmem>>, vector<8x128xf32>
    %cst_38 = arith.constant dense<0.000000e+00> : vector<8x128xf32>
    %70 = tpu.matmul %63, %10, %cst_38 {dimension_numbers = #tpu.dot_dimension_numbers<[1], [0], [0], [1], [0, 0, 1, 1], [], []>} : vector<8x128xf32>, vector<128x128xf32>, vector<8x128xf32> -> vector<8x128xf32>
    %71 = arith.addf %69, %70 : vector<8x128xf32>
    %72 = math.tanh %71 : vector<8x128xf32>
    %73 = arith.index_cast %67 : i32 to index
    %c0_39 = arith.constant 0 : index
    %74 = vector.load %arg11[%73, %c0_39] : memref<64x128xf32, #tpu.memory_space<vmem>>, vector<8x128xf32>
    tpu.vector_store %arg11[%73, %c0_39], %72 {strides = array<i32>} : memref<64x128xf32, #tpu.memory_space<vmem>>, vector<8x128xf32>,
    %c7_i32 = arith.constant 7 : i32
    %c8_i32_40 = arith.constant 8 : i32
    %75 = arith.muli %c7_i32, %c8_i32_40 : i32
    %76 = tpu.assume_multiple %75, 8 : i32
    %77 = arith.index_cast %76 : i32 to index
    %c0_41 = arith.constant 0 : index
    %78 = vector.load %arg10[%77, %c0_41] : memref<64x128xf32, #tpu.memory_space<vmem>>, vector<8x128xf32>
    %cst_42 = arith.constant dense<0.000000e+00> : vector<8x128xf32>
    %79 = tpu.matmul %72, %10, %cst_42 {dimension_numbers = #tpu.dot_dimension_numbers<[1], [0], [0], [1], [0, 0, 1, 1], [], []>} : vector<8x128xf32>, vector<128x128xf32>, vector<8x128xf32> -> vector<8x128xf32>
    %80 = arith.addf %78, %79 : vector<8x128xf32>
    %81 = math.tanh %80 : vector<8x128xf32>
    %82 = arith.index_cast %76 : i32 to index
    %c0_43 = arith.constant 0 : index
    %83 = vector.load %arg11[%82, %c0_43] : memref<64x128xf32, #tpu.memory_space<vmem>>, vector<8x128xf32>
    tpu.vector_store %arg11[%82, %c0_43], %81 {strides = array<i32>} : memref<64x128xf32, #tpu.memory_space<vmem>>, vector<8x128xf32>,
    %c8_i32_44 = arith.constant 8 : i32
    %c0_45 = arith.constant 0 : index
    %c0_46 = arith.constant 0 : index
    %84 = vector.load %arg9[%c0_45, %c0_46] : memref<8x128xf32, #tpu.memory_space<vmem>>, vector<8x128xf32>
    tpu.vector_store %arg9[%c0_45, %c0_46], %81 {strides = array<i32>} : memref<8x128xf32, #tpu.memory_space<vmem>>, vector<8x128xf32>,
    %c0_47 = arith.constant 0 : index
    %c0_48 = arith.constant 0 : index
    %85 = vector.load %arg11[%c0_47, %c0_48] : memref<64x128xf32, #tpu.memory_space<vmem>>, vector<64x128xf32>
    %c0_49 = arith.constant 0 : index
    %c0_50 = arith.constant 0 : index
    %86 = vector.load %arg6[%c0_49, %c0_50] : memref<128x128xf32, #tpu.memory_space<vmem>>, vector<128x128xf32>
    %cst_51 = arith.constant dense<0.000000e+00> : vector<64x128xf32>
    %87 = tpu.matmul %85, %86, %cst_51 {dimension_numbers = #tpu.dot_dimension_numbers<[1], [0], [0], [1], [0, 0, 1, 1], [], []>} : vector<64x128xf32>, vector<128x128xf32>, vector<64x128xf32> -> vector<64x128xf32>
    %c0_52 = arith.constant 0 : index
    %c0_53 = arith.constant 0 : index
    %88 = vector.load %arg7[%c0_52, %c0_53] : memref<1x128xf32, #tpu.memory_space<vmem>>, vector<1x128xf32>
    %89 = vector.broadcast %88 : vector<1x128xf32> to vector<64x128xf32>
    %90 = arith.addf %87, %89 : vector<64x128xf32>
    %c0_54 = arith.constant 0 : index
    %c0_55 = arith.constant 0 : index
    %91 = vector.load %arg8[%c0_54, %c0_55] : memref<64x128xf32, #tpu.memory_space<vmem>>, vector<64x128xf32>
    tpu.vector_store %arg8[%c0_54, %c0_55], %90 {strides = array<i32>} : memref<64x128xf32, #tpu.memory_space<vmem>>, vector<64x128xf32>,
    return
  }
  func.func @transform_0(%arg0: i32) -> (i32, i32) {
    %c0_i32 = arith.constant 0 : i32
    %c0_i32_0 = arith.constant 0 : i32
    return %arg0, %c0_i32 : i32, i32
  }
  func.func @transform_1(%arg0: i32) -> (i32, i32) {
    %c0_i32 = arith.constant 0 : i32
    %c0_i32_0 = arith.constant 0 : i32
    %c0_i32_1 = arith.constant 0 : i32
    return %c0_i32, %c0_i32_0 : i32, i32
  }
  func.func @transform_2(%arg0: i32) -> (i32, i32) {
    %c0_i32 = arith.constant 0 : i32
    %c0_i32_0 = arith.constant 0 : i32
    %c0_i32_1 = arith.constant 0 : i32
    return %c0_i32, %c0_i32_0 : i32, i32
  }
  func.func @transform_3(%arg0: i32) -> (i32, i32) {
    %c0_i32 = arith.constant 0 : i32
    %c0_i32_0 = arith.constant 0 : i32
    %c0_i32_1 = arith.constant 0 : i32
    return %c0_i32, %c0_i32_0 : i32, i32
  }
  func.func @transform_4(%arg0: i32) -> (i32, i32) {
    %c0_i32 = arith.constant 0 : i32
    %c0_i32_0 = arith.constant 0 : i32
    %c0_i32_1 = arith.constant 0 : i32
    return %c0_i32, %c0_i32_0 : i32, i32
  }
  func.func @transform_5(%arg0: i32) -> (i32, i32) {
    %c0_i32 = arith.constant 0 : i32
    %c0_i32_0 = arith.constant 0 : i32
    %c0_i32_1 = arith.constant 0 : i32
    return %c0_i32, %c0_i32_0 : i32, i32
  }
  func.func @transform_6(%arg0: i32) -> (i32, i32) {
    %c0_i32 = arith.constant 0 : i32
    %c0_i32_0 = arith.constant 0 : i32
    %c0_i32_1 = arith.constant 0 : i32
    return %c0_i32, %c0_i32_0 : i32, i32
  }
  func.func @transform_7(%arg0: i32) -> (i32, i32) {
    %c0_i32 = arith.constant 0 : i32
    %c0_i32_0 = arith.constant 0 : i32
    return %arg0, %c0_i32 : i32, i32
  }
  func.func @transform_8(%arg0: i32) -> (i32, i32) {
    %c0_i32 = arith.constant 0 : i32
    %c0_i32_0 = arith.constant 0 : i32
    %c0_i32_1 = arith.constant 0 : i32
    return %c0_i32, %c0_i32_0 : i32, i32
  }
}

</mosaic_0001>

<llo_original>
// kernel: rnn_forward.1
$region0: #{rnn_forward.1}
  #allocation0 [shape = 'u32[]', space=smem, size = 0x4, offset = 0x4, fixed_abs, tag = 'smem constant byte address 0x4 - core index']
  #allocation1 [shape = 'u32[72,128]{1,0:T(1,128)}', space=vmem, size = 0x9000, scoped, tag = 'internal scratch']
  #allocation2 [shape = 'f32[64,128]{1,0:T(8,128)}', space=vmem, size = 0x8000, scoped, tag = 'scratch operand']
  #allocation3 [shape = 'f32[64,128]{1,0:T(8,128)}', space=vmem, size = 0x8000, scoped, tag = 'scratch operand']
  %s0 = inlined_call_operand.vmem [shape: f32[64,4], index: 0, kind: input, shape index: {}]
  %s1 = inlined_call_operand.vmem [shape: f32[8,128], index: 1, kind: input, shape index: {}]
  %s2 = inlined_call_operand.vmem [shape: f32[4,128], index: 2, kind: input, shape index: {}]
  %s3 = inlined_call_operand.vmem [shape: f32[128,128], index: 3, kind: input, shape index: {}]
  %s4 = inlined_call_operand.vmem [shape: f32[1,128], index: 4, kind: input, shape index: {}]
  %s5 = inlined_call_operand.vmem [shape: f32[128,128], index: 5, kind: input, shape index: {}]
  %s6 = inlined_call_operand.vmem [shape: f32[1,128], index: 6, kind: input, shape index: {}]
  %s7 = inlined_call_operand.vmem [shape: f32[64,128], index: 7, kind: output, shape index: {0}]
  %s8 = inlined_call_operand.vmem [shape: f32[8,128], index: 8, kind: output, shape index: {1}]
  %9 = xla_tuple %s7, %s8
  %s10 = sld [smem:[#allocation0]]
  $region50: #{rnn_forward.1} parent=0
    _
  %s12 = ssub.s32 1, %s10
  %s13 = scalar_select 0, %s12, %s10
  // Predicated region
  $region2: #{rnn_forward.1} parent=0 // pred_check
    _
  $region3: #{rnn_forward.1} parent=0 // pred_check_branch
    %15 = sbr.rel (0) target = $region5
  $region4: #{rnn_forward.1} parent=0 // pred_region
    _
  $region5: #{rnn_forward.1} parent=0 // pred_fallthru
    _
  // Predicated region
  $region6: #{rnn_forward.1} parent=0 // pred_check
    _
  $region7: #{rnn_forward.1} parent=0 // pred_check_branch
    %17 = sbr.rel (0) target = $region9
  $region8: #{rnn_forward.1} parent=0 // pred_region
    _
  $region9: #{rnn_forward.1} parent=0 // pred_fallthru
    _
  // Predicated region
  $region10: #{rnn_forward.1} parent=0 // pred_check
    _
  $region11: #{rnn_forward.1} parent=0 // pred_check_branch
    %19 = sbr.rel (0) target = $region13
  $region12: #{rnn_forward.1} parent=0 // pred_region
    _
  $region13: #{rnn_forward.1} parent=0 // pred_fallthru
    _
  // Predicated region
  $region14: #{rnn_forward.1} parent=0 // pred_check
    _
  $region15: #{rnn_forward.1} parent=0 // pred_check_branch
    %21 = sbr.rel (0) target = $region17
  $region16: #{rnn_forward.1} parent=0 // pred_region
    _
  $region17: #{rnn_forward.1} parent=0 // pred_fallthru
    _
  // Predicated region
  $region18: #{rnn_forward.1} parent=0 // pred_check
    _
  $region19: #{rnn_forward.1} parent=0 // pred_check_branch
    %23 = sbr.rel (0) target = $region21
  $region20: #{rnn_forward.1} parent=0 // pred_region
    _
  $region21: #{rnn_forward.1} parent=0 // pred_fallthru
    _
  // Predicated region
  $region22: #{rnn_forward.1} parent=0 // pred_check
    _
  $region23: #{rnn_forward.1} parent=0 // pred_check_branch
    %25 = sbr.rel (0) target = $region25
  $region24: #{rnn_forward.1} parent=0 // pred_region
    _
  $region25: #{rnn_forward.1} parent=0 // pred_fallthru
    _
  // Predicated region
  $region26: #{rnn_forward.1} parent=0 // pred_check
    _
  $region27: #{rnn_forward.1} parent=0 // pred_check_branch
    %27 = sbr.rel (0) target = $region29
  $region28: #{rnn_forward.1} parent=0 // pred_region
    _
  $region29: #{rnn_forward.1} parent=0 // pred_fallthru
    _
  %p28 = scmp.eq.s32.totalorder 0, 0
  // Predicated region
  $region30: #{rnn_forward.1} parent=0 // pred_check
    %p29 = pneg %p28
  $region31: #{rnn_forward.1} parent=0 // pred_check_branch
    %31 = sbr.rel (%p29) target = $region33
  $region32: #{rnn_forward.1} parent=0 // pred_region
    %v32 = vld [vmem:[%s1] sm:$0xff]
    %33 = vst [vmem:[%s8] sm:$0xff] %v32
  $region33: #{rnn_forward.1} parent=0 // pred_fallthru
    _
  %v34 = vld [vmem:[%s0] sm:$0xff]
  %v35 = vld [vmem:[%s0 + $0x8] sm:$0xff]
  %v36 = vld [vmem:[%s0 + $0x10] sm:$0xff]
  %v37 = vld [vmem:[%s0 + $0x18] sm:$0xff]
  %v38 = vld [vmem:[%s0 + $0x20] sm:$0xff]
  %v39 = vld [vmem:[%s0 + $0x28] sm:$0xff]
  %v40 = vld [vmem:[%s0 + $0x30] sm:$0xff]
  %v41 = vld [vmem:[%s0 + $0x38] sm:$0xff]
  %v42 = vld [vmem:[%s2] sm:$0xf]
  %v43 = vld [vmem:[%s4] sm:$0x1]
  %v45 = vperm.slane %v43, 0
  %vm47 = vcmask 31744
  %v49 = vsel %vm47, %v34, 0
  %v52 = vsel %vm47, %v35, 0
  %v55 = vsel %vm47, %v36, 0
  %v58 = vsel %vm47, %v37, 0
  %v61 = vsel %vm47, %v38, 0
  %v64 = vsel %vm47, %v39, 0
  %v67 = vsel %vm47, %v40, 0
  %v70 = vsel %vm47, %v41, 0
  %vm72 = vcmask 1043456
  %v74 = vsel %vm72, %v42, 0
  %76 = vmatpush.msra.mxu0 0.0
  %77 = vmatpush.msra.mxu0 0.0
  %78 = vmatpush.msra.mxu0 0.0
  %79 = vmatpush.msra.mxu0 0.0
  %80 = vmatpush.msra.mxu0 0.0
  %81 = vmatpush.msra.mxu0 0.0
  %82 = vmatpush.msra.mxu0 0.0
  %83 = vmatpush.msra.mxu0 0.0
  %84 = vmatpush.msra.mxu0 0.0
  %85 = vmatpush.msra.mxu0 0.0
  %86 = vmatpush.msra.mxu0 0.0
  %87 = vmatpush.msra.mxu0 0.0
  %88 = vmatpush.msra.mxu0 0.0
  %89 = vmatpush.msra.mxu0 0.0
  %90 = vmatpush.msra.mxu0 0.0
  %91 = vmatpush.msra.mxu0 %v74
  %92 = vmatmul.f32.gmra.mxu0 %v49
  %v93 = vpop.f32.mrf.mxu0
  %v94 = vadd.f32 %v45, %v93
  %95 = vmatmul.f32.gmra.mxu0 %v52
  %v96 = vpop.f32.mrf.mxu0
  %v97 = vadd.f32 %v45, %v96
  %98 = vmatmul.f32.gmra.mxu0 %v55
  %v99 = vpop.f32.mrf.mxu0
  %v100 = vadd.f32 %v45, %v99
  %101 = vmatmul.f32.gmra.mxu0 %v58
  %v102 = vpop.f32.mrf.mxu0
  %v103 = vadd.f32 %v45, %v102
  %104 = vmatmul.f32.gmra.mxu0 %v61
  %v105 = vpop.f32.mrf.mxu0
  %v106 = vadd.f32 %v45, %v105
  %107 = vmatmul.f32.gmra.mxu0 %v64
  %v108 = vpop.f32.mrf.mxu0
  %v109 = vadd.f32 %v45, %v108
  %110 = vmatmul.f32.gmra.mxu0 %v67
  %v111 = vpop.f32.mrf.mxu0
  %v112 = vadd.f32 %v45, %v111
  %113 = vmatmul.f32.gmra.mxu0 %v70
  %v114 = vpop.f32.mrf.mxu0
  %v115 = vadd.f32 %v45, %v114
  %116 = vdwg.mxu0
  %117 = vst [vmem:[#allocation2] sm:$0xff] %v94
  %118 = vst [vmem:[#allocation2 + $0x8] sm:$0xff] %v97
  %119 = vst [vmem:[#allocation2 + $0x10] sm:$0xff] %v100
  %120 = vst [vmem:[#allocation2 + $0x18] sm:$0xff] %v103
  %121 = vst [vmem:[#allocation2 + $0x20] sm:$0xff] %v106
  %122 = vst [vmem:[#allocation2 + $0x28] sm:$0xff] %v109
  %123 = vst [vmem:[#allocation2 + $0x30] sm:$0xff] %v112
  %124 = vst [vmem:[#allocation2 + $0x38] sm:$0xff] %v115
  %v125 = vld [vmem:[%s3] sm:$0xff]
  %v126 = vld [vmem:[%s3 + $0x8] sm:$0xff]
  %v127 = vld [vmem:[%s3 + $0x10] sm:$0xff]
  %v128 = vld [vmem:[%s3 + $0x18] sm:$0xff]
  %v129 = vld [vmem:[%s3 + $0x20] sm:$0xff]
  %v130 = vld [vmem:[%s3 + $0x28] sm:$0xff]
  %v131 = vld [vmem:[%s3 + $0x30] sm:$0xff]
  %v132 = vld [vmem:[%s3 + $0x38] sm:$0xff]
  %v133 = vld [vmem:[%s3 + $0x40] sm:$0xff]
  %v134 = vld [vmem:[%s3 + $0x48] sm:$0xff]
  %v135 = vld [vmem:[%s3 + $0x50] sm:$0xff]
  %v136 = vld [vmem:[%s3 + $0x58] sm:$0xff]
  %v137 = vld [vmem:[%s3 + $0x60] sm:$0xff]
  %v138 = vld [vmem:[%s3 + $0x68] sm:$0xff]
  %v139 = vld [vmem:[%s3 + $0x70] sm:$0xff]
  %v140 = vld [vmem:[%s3 + $0x78] sm:$0xff]
  %v141 = vld [vmem:[%s8] sm:$0xff]
  %v142 = vld [vmem:[#allocation2] sm:$0xff]
  %143 = vmatpush.msra.mxu0 %v140
  %144 = vmatpush.msra.mxu0 %v139
  %145 = vmatpush.msra.mxu0 %v138
  %146 = vmatpush.msra.mxu0 %v137
  %147 = vmatpush.msra.mxu0 %v136
  %148 = vmatpush.msra.mxu0 %v135
  %149 = vmatpush.msra.mxu0 %v134
  %150 = vmatpush.msra.mxu0 %v133
  %151 = vmatpush.msra.mxu0 %v132
  %152 = vmatpush.msra.mxu0 %v131
  %153 = vmatpush.msra.mxu0 %v130
  %154 = vmatpush.msra.mxu0 %v129
  %155 = vmatpush.msra.mxu0 %v128
  %156 = vmatpush.msra.mxu0 %v127
  %157 = vmatpush.msra.mxu0 %v126
  %158 = vmatpush.msra.mxu0 %v125
  %159 = vmatmul.f32.gmra.mxu0 %v141
  %v160 = vpop.f32.mrf.mxu0
  %v161 = vadd.f32 0.0, %v160
  %162 = vdwg.mxu0
  %v163 = vadd.f32 %v142, %v161
  %v164 = vtanh.pop %v163
  %165 = vst [vmem:[#allocation3] sm:$0xff] %v164
  %s166 = scalar_lea.vmem [#allocation2], 8
  %v167 = vld [vmem:[%s166] sm:$0xff]
  %168 = vmatpush.msra.mxu0 %v140
  %169 = vmatpush.msra.mxu0 %v139
  %170 = vmatpush.msra.mxu0 %v138
  %171 = vmatpush.msra.mxu0 %v137
  %172 = vmatpush.msra.mxu0 %v136
  %173 = vmatpush.msra.mxu0 %v135
  %174 = vmatpush.msra.mxu0 %v134
  %175 = vmatpush.msra.mxu0 %v133
  %176 = vmatpush.msra.mxu0 %v132
  %177 = vmatpush.msra.mxu0 %v131
  %178 = vmatpush.msra.mxu0 %v130
  %179 = vmatpush.msra.mxu0 %v129
  %180 = vmatpush.msra.mxu0 %v128
  %181 = vmatpush.msra.mxu0 %v127
  %182 = vmatpush.msra.mxu0 %v126
  %183 = vmatpush.msra.mxu0 %v125
  %184 = vmatmul.f32.gmra.mxu0 %v164
  %v185 = vpop.f32.mrf.mxu0
  %v186 = vadd.f32 0.0, %v185
  %187 = vdwg.mxu0
  %v188 = vadd.f32 %v167, %v186
  %v189 = vtanh.pop %v188
  %s190 = scalar_lea.vmem [#allocation3], 8
  %191 = vst [vmem:[%s190] sm:$0xff] %v189
  %s192 = scalar_lea.vmem [#allocation2], 16
  %v193 = vld [vmem:[%s192] sm:$0xff]
  %194 = vmatpush.msra.mxu0 %v140
  %195 = vmatpush.msra.mxu0 %v139
  %196 = vmatpush.msra.mxu0 %v138
  %197 = vmatpush.msra.mxu0 %v137
  %198 = vmatpush.msra.mxu0 %v136
  %199 = vmatpush.msra.mxu0 %v135
  %200 = vmatpush.msra.mxu0 %v134
  %201 = vmatpush.msra.mxu0 %v133
  %202 = vmatpush.msra.mxu0 %v132
  %203 = vmatpush.msra.mxu0 %v131
  %204 = vmatpush.msra.mxu0 %v130
  %205 = vmatpush.msra.mxu0 %v129
  %206 = vmatpush.msra.mxu0 %v128
  %207 = vmatpush.msra.mxu0 %v127
  %208 = vmatpush.msra.mxu0 %v126
  %209 = vmatpush.msra.mxu0 %v125
  %210 = vmatmul.f32.gmra.mxu0 %v189
  %v211 = vpop.f32.mrf.mxu0
  %v212 = vadd.f32 0.0, %v211
  %213 = vdwg.mxu0
  %v214 = vadd.f32 %v193, %v212
  %v215 = vtanh.pop %v214
  %s216 = scalar_lea.vmem [#allocation3], 16
  %217 = vst [vmem:[%s216] sm:$0xff] %v215
  %s218 = scalar_lea.vmem [#allocation2], 24
  %v219 = vld [vmem:[%s218] sm:$0xff]
  %220 = vmatpush.msra.mxu0 %v140
  %221 = vmatpush.msra.mxu0 %v139
  %222 = vmatpush.msra.mxu0 %v138
  %223 = vmatpush.msra.mxu0 %v137
  %224 = vmatpush.msra.mxu0 %v136
  %225 = vmatpush.msra.mxu0 %v135
  %226 = vmatpush.msra.mxu0 %v134
  %227 = vmatpush.msra.mxu0 %v133
  %228 = vmatpush.msra.mxu0 %v132
  %229 = vmatpush.msra.mxu0 %v131
  %230 = vmatpush.msra.mxu0 %v130
  %231 = vmatpush.msra.mxu0 %v129
  %232 = vmatpush.msra.mxu0 %v128
  %233 = vmatpush.msra.mxu0 %v127
  %234 = vmatpush.msra.mxu0 %v126
  %235 = vmatpush.msra.mxu0 %v125
  %236 = vmatmul.f32.gmra.mxu0 %v215
  %v237 = vpop.f32.mrf.mxu0
  %v238 = vadd.f32 0.0, %v237
  %239 = vdwg.mxu0
  %v240 = vadd.f32 %v219, %v238
  %v241 = vtanh.pop %v240
  %s242 = scalar_lea.vmem [#allocation3], 24
  %243 = vst [vmem:[%s242] sm:$0xff] %v241
  %s244 = scalar_lea.vmem [#allocation2], 32
  %v245 = vld [vmem:[%s244] sm:$0xff]
  %246 = vmatpush.msra.mxu0 %v140
  %247 = vmatpush.msra.mxu0 %v139
  %248 = vmatpush.msra.mxu0 %v138
  %249 = vmatpush.msra.mxu0 %v137
  %250 = vmatpush.msra.mxu0 %v136
  %251 = vmatpush.msra.mxu0 %v135
  %252 = vmatpush.msra.mxu0 %v134
  %253 = vmatpush.msra.mxu0 %v133
  %254 = vmatpush.msra.mxu0 %v132
  %255 = vmatpush.msra.mxu0 %v131
  %256 = vmatpush.msra.mxu0 %v130
  %257 = vmatpush.msra.mxu0 %v129
  %258 = vmatpush.msra.mxu0 %v128
  %259 = vmatpush.msra.mxu0 %v127
  %260 = vmatpush.msra.mxu0 %v126
  %261 = vmatpush.msra.mxu0 %v125
  %262 = vmatmul.f32.gmra.mxu0 %v241
  %v263 = vpop.f32.mrf.mxu0
  %v264 = vadd.f32 0.0, %v263
  %265 = vdwg.mxu0
  %v266 = vadd.f32 %v245, %v264
  %v267 = vtanh.pop %v266
  %s268 = scalar_lea.vmem [#allocation3], 32
  %269 = vst [vmem:[%s268] sm:$0xff] %v267
  %s270 = scalar_lea.vmem [#allocation2], 40
  %v271 = vld [vmem:[%s270] sm:$0xff]
  %272 = vmatpush.msra.mxu0 %v140
  %273 = vmatpush.msra.mxu0 %v139
  %274 = vmatpush.msra.mxu0 %v138
  %275 = vmatpush.msra.mxu0 %v137
  %276 = vmatpush.msra.mxu0 %v136
  %277 = vmatpush.msra.mxu0 %v135
  %278 = vmatpush.msra.mxu0 %v134
  %279 = vmatpush.msra.mxu0 %v133
  %280 = vmatpush.msra.mxu0 %v132
  %281 = vmatpush.msra.mxu0 %v131
  %282 = vmatpush.msra.mxu0 %v130
  %283 = vmatpush.msra.mxu0 %v129
  %284 = vmatpush.msra.mxu0 %v128
  %285 = vmatpush.msra.mxu0 %v127
  %286 = vmatpush.msra.mxu0 %v126
  %287 = vmatpush.msra.mxu0 %v125
  %288 = vmatmul.f32.gmra.mxu0 %v267
  %v289 = vpop.f32.mrf.mxu0
  %v290 = vadd.f32 0.0, %v289
  %291 = vdwg.mxu0
  %v292 = vadd.f32 %v271, %v290
  %v293 = vtanh.pop %v292
  %s294 = scalar_lea.vmem [#allocation3], 40
  %295 = vst [vmem:[%s294] sm:$0xff] %v293
  %s296 = scalar_lea.vmem [#allocation2], 48
  %v297 = vld [vmem:[%s296] sm:$0xff]
  %298 = vmatpush.msra.mxu0 %v140
  %299 = vmatpush.msra.mxu0 %v139
  %300 = vmatpush.msra.mxu0 %v138
  %301 = vmatpush.msra.mxu0 %v137
  %302 = vmatpush.msra.mxu0 %v136
  %303 = vmatpush.msra.mxu0 %v135
  %304 = vmatpush.msra.mxu0 %v134
  %305 = vmatpush.msra.mxu0 %v133
  %306 = vmatpush.msra.mxu0 %v132
  %307 = vmatpush.msra.mxu0 %v131
  %308 = vmatpush.msra.mxu0 %v130
  %309 = vmatpush.msra.mxu0 %v129
  %310 = vmatpush.msra.mxu0 %v128
  %311 = vmatpush.msra.mxu0 %v127
  %312 = vmatpush.msra.mxu0 %v126
  %313 = vmatpush.msra.mxu0 %v125
  %314 = vmatmul.f32.gmra.mxu0 %v293
  %v315 = vpop.f32.mrf.mxu0
  %v316 = vadd.f32 0.0, %v315
  %317 = vdwg.mxu0
  %v318 = vadd.f32 %v297, %v316
  %v319 = vtanh.pop %v318
  %s320 = scalar_lea.vmem [#allocation3], 48
  %321 = vst [vmem:[%s320] sm:$0xff] %v319
  %s322 = scalar_lea.vmem [#allocation2], 56
  %v323 = vld [vmem:[%s322] sm:$0xff]
  %324 = vmatpush.msra.mxu0 %v140
  %325 = vmatpush.msra.mxu0 %v139
  %326 = vmatpush.msra.mxu0 %v138
  %327 = vmatpush.msra.mxu0 %v137
  %328 = vmatpush.msra.mxu0 %v136
  %329 = vmatpush.msra.mxu0 %v135
  %330 = vmatpush.msra.mxu0 %v134
  %331 = vmatpush.msra.mxu0 %v133
  %332 = vmatpush.msra.mxu0 %v132
  %333 = vmatpush.msra.mxu0 %v131
  %334 = vmatpush.msra.mxu0 %v130
  %335 = vmatpush.msra.mxu0 %v129
  %336 = vmatpush.msra.mxu0 %v128
  %337 = vmatpush.msra.mxu0 %v127
  %338 = vmatpush.msra.mxu0 %v126
  %339 = vmatpush.msra.mxu0 %v125
  %340 = vmatmul.f32.gmra.mxu0 %v319
  %v341 = vpop.f32.mrf.mxu0
  %v342 = vadd.f32 0.0, %v341
  %343 = vdwg.mxu0
  %v344 = vadd.f32 %v323, %v342
  %v345 = vtanh.pop %v344
  %s346 = scalar_lea.vmem [#allocation3], 56
  %347 = vst [vmem:[%s346] sm:$0xff] %v345
  %348 = vst [vmem:[%s8] sm:$0xff] %v345
  %v349 = vld [vmem:[#allocation3] sm:$0xff]
  %v350 = vld [vmem:[#allocation3 + $0x8] sm:$0xff]
  %v351 = vld [vmem:[#allocation3 + $0x10] sm:$0xff]
  %v352 = vld [vmem:[#allocation3 + $0x18] sm:$0xff]
  %v353 = vld [vmem:[#allocation3 + $0x20] sm:$0xff]
  %v354 = vld [vmem:[#allocation3 + $0x28] sm:$0xff]
  %v355 = vld [vmem:[#allocation3 + $0x30] sm:$0xff]
  %v356 = vld [vmem:[#allocation3 + $0x38] sm:$0xff]
  %v357 = vld [vmem:[%s5] sm:$0xff]
  %v358 = vld [vmem:[%s5 + $0x8] sm:$0xff]
  %v359 = vld [vmem:[%s5 + $0x10] sm:$0xff]
  %v360 = vld [vmem:[%s5 + $0x18] sm:$0xff]
  %v361 = vld [vmem:[%s5 + $0x20] sm:$0xff]
  %v362 = vld [vmem:[%s5 + $0x28] sm:$0xff]
  %v363 = vld [vmem:[%s5 + $0x30] sm:$0xff]
  %v364 = vld [vmem:[%s5 + $0x38] sm:$0xff]
  %v365 = vld [vmem:[%s5 + $0x40] sm:$0xff]
  %v366 = vld [vmem:[%s5 + $0x48] sm:$0xff]
  %v367 = vld [vmem:[%s5 + $0x50] sm:$0xff]
  %v368 = vld [vmem:[%s5 + $0x58] sm:$0xff]
  %v369 = vld [vmem:[%s5 + $0x60] sm:$0xff]
  %v370 = vld [vmem:[%s5 + $0x68] sm:$0xff]
  %v371 = vld [vmem:[%s5 + $0x70] sm:$0xff]
  %v372 = vld [vmem:[%s5 + $0x78] sm:$0xff]
  %v373 = vld [vmem:[%s6] sm:$0x1]
  %v375 = vperm.slane %v373, 0
  %377 = vmatpush.msra.mxu0 %v372
  %378 = vmatpush.msra.mxu0 %v371
  %379 = vmatpush.msra.mxu0 %v370
  %380 = vmatpush.msra.mxu0 %v369
  %381 = vmatpush.msra.mxu0 %v368
  %382 = vmatpush.msra.mxu0 %v367
  %383 = vmatpush.msra.mxu0 %v366
  %384 = vmatpush.msra.mxu0 %v365
  %385 = vmatpush.msra.mxu0 %v364
  %386 = vmatpush.msra.mxu0 %v363
  %387 = vmatpush.msra.mxu0 %v362
  %388 = vmatpush.msra.mxu0 %v361
  %389 = vmatpush.msra.mxu0 %v360
  %390 = vmatpush.msra.mxu0 %v359
  %391 = vmatpush.msra.mxu0 %v358
  %392 = vmatpush.msra.mxu0 %v357
  %393 = vmatmul.f32.gmra.mxu0 %v349
  %v394 = vpop.f32.mrf.mxu0
  %v395 = vadd.f32 %v375, %v394
  %396 = vmatmul.f32.gmra.mxu0 %v350
  %v397 = vpop.f32.mrf.mxu0
  %v398 = vadd.f32 %v375, %v397
  %399 = vmatmul.f32.gmra.mxu0 %v351
  %v400 = vpop.f32.mrf.mxu0
  %v401 = vadd.f32 %v375, %v400
  %402 = vmatmul.f32.gmra.mxu0 %v352
  %v403 = vpop.f32.mrf.mxu0
  %v404 = vadd.f32 %v375, %v403
  %405 = vmatmul.f32.gmra.mxu0 %v353
  %v406 = vpop.f32.mrf.mxu0
  %v407 = vadd.f32 %v375, %v406
  %408 = vmatmul.f32.gmra.mxu0 %v354
  %v409 = vpop.f32.mrf.mxu0
  %v410 = vadd.f32 %v375, %v409
  %411 = vmatmul.f32.gmra.mxu0 %v355
  %v412 = vpop.f32.mrf.mxu0
  %v413 = vadd.f32 %v375, %v412
  %414 = vmatmul.f32.gmra.mxu0 %v356
  %v415 = vpop.f32.mrf.mxu0
  %v416 = vadd.f32 %v375, %v415
  %417 = vdwg.mxu0
  %418 = vst [vmem:[%s7] sm:$0xff] %v395
  %419 = vst [vmem:[%s7 + $0x8] sm:$0xff] %v398
  %420 = vst [vmem:[%s7 + $0x10] sm:$0xff] %v401
  %421 = vst [vmem:[%s7 + $0x18] sm:$0xff] %v404
  %422 = vst [vmem:[%s7 + $0x20] sm:$0xff] %v407
  %423 = vst [vmem:[%s7 + $0x28] sm:$0xff] %v410
  %424 = vst [vmem:[%s7 + $0x30] sm:$0xff] %v413
  %425 = vst [vmem:[%s7 + $0x38] sm:$0xff] %v416
  // Predicated region
  $region34: #{rnn_forward.1} parent=0 // pred_check
    _
  $region35: #{rnn_forward.1} parent=0 // pred_check_branch
    %427 = sbr.rel (0) target = $region37
  $region36: #{rnn_forward.1} parent=0 // pred_region
    _
  $region37: #{rnn_forward.1} parent=0 // pred_fallthru
    _
  // Predicated region
  $region38: #{rnn_forward.1} parent=0 // pred_check
    _
  $region39: #{rnn_forward.1} parent=0 // pred_check_branch
    %429 = sbr.rel (0) target = $region41
  $region40: #{rnn_forward.1} parent=0 // pred_region
    _
  $region41: #{rnn_forward.1} parent=0 // pred_fallthru
    _
  // Predicated region
  $region42: #{rnn_forward.1} parent=0 // pred_check
    _
  $region43: #{rnn_forward.1} parent=0 // pred_check_branch
    %431 = sbr.rel (0) target = $region45
  $region44: #{rnn_forward.1} parent=0 // pred_region
    _
  $region45: #{rnn_forward.1} parent=0 // pred_fallthru
    _
  // Predicated region
  $region46: #{rnn_forward.1} parent=0 // pred_check
    _
  $region47: #{rnn_forward.1} parent=0 // pred_check_branch
    %433 = sbr.rel (0) target = $region49
  $region48: #{rnn_forward.1} parent=0 // pred_region
    _
  $region49: #{rnn_forward.1} parent=0 // pred_fallthru
    _

</llo_original>
